<compile_context>
chip_gen: v7x
topology: tpu7x:2x2x1
jax: 0.10.0
libtpu: 0.0.40
codegen_flags: <defaults>
</compile_context>

<pallas_src>
import jax
import jax.numpy as jnp
from jax.experimental import pallas as pl
from jax.experimental.pallas import tpu as pltpu

EPS = 2e-5  # matches nn.BatchNorm2d(eps=2e-05)


def _basic_block_kernel(x_ref, w1_ref, w2_ref, p_ref, o_ref):
    H = x_ref.shape[0]
    l_in = x_ref.shape[1]        # G * W * Cin
    l_mid = w1_ref.shape[2]      # G * W * Cmid
    l_out = o_ref.shape[1]       # G * W * Cout
    f32 = jnp.float32
    mm_dtype = w1_ref.dtype      # matmul operand dtype (bf16 by default)

    # Vertical shift-by-one matrices with the H-boundary zero row built in.
    # (D @ a)[h] = a[h-1] (0 at h=0);  (U @ a)[h] = a[h+1] (0 at h=H-1).
    ri = jax.lax.broadcasted_iota(jnp.int32, (H, H), 0)
    ci = jax.lax.broadcasted_iota(jnp.int32, (H, H), 1)
    shift_dn = jnp.where(ri == ci + 1, 1.0, 0.0).astype(mm_dtype)
    shift_up = jnp.where(ci == ri + 1, 1.0, 0.0).astype(mm_dtype)

    def conv3x3_banded(act_f32, w_ref):
        # conv3x3(pad=1): out[h] = a[h-1] @ B0 + a[h] @ B1 + a[h+1] @ B2,
        # with the W-direction taps / zero padding folded into B0/B1/B2 and the
        # H-direction zero padding folded into the shift matrices.
        a = act_f32.astype(mm_dtype)
        a_dn = jnp.dot(shift_dn, a, preferred_element_type=f32).astype(mm_dtype)
        a_up = jnp.dot(shift_up, a, preferred_element_type=f32).astype(mm_dtype)
        out = jnp.dot(a_dn, w_ref[0], preferred_element_type=f32)
        out = out + jnp.dot(a, w_ref[1], preferred_element_type=f32)
        out = out + jnp.dot(a_up, w_ref[2], preferred_element_type=f32)
        return out

    x = x_ref[...].astype(f32)                                   # (H, G*W*Cin)

    # ---- bn1 (folded scale/shift, pre-tiled across (G, W): rows 0/1)
    y = x * p_ref[0:1, :l_in] + p_ref[1:2, :l_in]

    # ---- conv1
    t = conv3x3_banded(y, w1_ref)                                # (H, G*W*Cmid)

    # ---- bn2 + PReLU (rows 2/3/4)
    t = t * p_ref[2:3, :l_mid] + p_ref[3:4, :l_mid]
    t = jnp.where(t >= 0, t, p_ref[4:5, :l_mid] * t)

    # ---- conv2
    o = conv3x3_banded(t, w2_ref)                                # (H, G*W*Cout)

    # ---- bn3 + residual (stride=1, downsample=None, Cout == Cin): rows 5/6
    o = o * p_ref[5:6, :l_out] + p_ref[6:7, :l_out] + x
    o_ref[...] = o.astype(o_ref.dtype)


# --------------------------------------------------------------------------- #
# Parameter-only preprocessing (exact algebra, glue not hot-path)
# --------------------------------------------------------------------------- #
def _fold_bn(bn):
    g, b, m, v = bn
    s = g / jnp.sqrt(v + EPS)
    return s, b - m * s


def _band(w_oihw, ci, co, W, G, dtype):
    """(co, ci, 3, 3) -> (3, G*W*ci, G*W*co) block-diagonal banded matrices.

    conv3x3(y) with W-padding ==  sum_dy  y_rows_shifted[dy] @ band[dy],
    where the horizontal taps and the W-direction zero padding are folded into
    the band, and the band is block-diagonal over the G lane-packed images.
    """
    w_hwio = jnp.transpose(w_oihw, (2, 3, 1, 0)).astype(jnp.float32)  # (3,3,ci,co)
    wi = jnp.arange(W)[:, None]                 # input column
    wo = jnp.arange(W)[None, :]                 # output column
    dx = wi - wo + 1                            # horizontal tap index 0..2
    sel = w_hwio[:, jnp.clip(dx, 0, 2)]         # (3, W, W, ci, co)
    sel = jnp.where(((dx >= 0) & (dx <= 2))[None, :, :, None, None], sel, 0.0)
    b = sel.transpose(0, 1, 3, 2, 4).reshape(3, W * ci, W * co)
    eye = jnp.eye(G, dtype=b.dtype)
    b = jnp.einsum("gh,kab->kgahb", eye, b).reshape(3, G * W * ci, G * W * co)
    return b.astype(dtype)


def prepare_block_params(w1, w2, bn1, bn2, bn3, prelu_alpha, W, G,
                         matmul_dtype=jnp.bfloat16):
    """Builds the banded conv weights and the packed BN/PReLU parameter block."""
    Cmid, Cin = int(w1.shape[0]), int(w1.shape[1])
    Cout = int(w2.shape[0])

    w1b = _band(w1, Cin, Cmid, W, G, matmul_dtype)     # (3, G*W*Cin, G*W*Cmid)
    w2b = _band(w2, Cmid, Cout, W, G, matmul_dtype)    # (3, G*W*Cmid, G*W*Cout)

    s1, b1 = _fold_bn(bn1)
    s2, b2 = _fold_bn(bn2)
    s3, b3 = _fold_bn(bn3)
    lanes = max(G * W * Cin, G * W * Cmid, G * W * Cout)

    def row(v):
        t = jnp.tile(v.astype(jnp.float32), G * W)
        return jnp.pad(t, (0, lanes - t.shape[0]))

    params = jnp.stack([row(s1), row(b1), row(s2), row(b2),
                        row(prelu_alpha), row(s3), row(b3),
                        jnp.zeros((lanes,), jnp.float32)])      # (8, lanes)
    return w1b, w2b, params


# --------------------------------------------------------------------------- #
# Pallas call wrappers
# --------------------------------------------------------------------------- #
def basic_block_v3_rows(x_rows, w1b, w2b, params, *, H):
    """Lane-dense entry point: x_rows is ((N/G)*H, G*W*Cin), returns the same
    layout for the output so chained blocks avoid NCHW relayouts."""
    rows, l_in = x_rows.shape
    num_groups = rows // H
    l_mid = w1b.shape[2]
    l_out = w2b.shape[2]

    flops = int(2 * num_groups * H * 3 * (l_in * l_mid + l_mid * l_out))
    bytes_accessed = int(x_rows.size * 4 + num_groups * H * l_out * 4
                         + w1b.size * w1b.dtype.itemsize
                         + w2b.size * w2b.dtype.itemsize
                         + params.size * 4)

    grid_spec = pltpu.PrefetchScalarGridSpec(
        num_scalar_prefetch=0,
        grid=(num_groups,),
        in_specs=[
            pl.BlockSpec((H, l_in), lambda p: (p, 0)),       # group p rows
            pl.BlockSpec(w1b.shape, lambda p: (0, 0, 0)),    # banded conv1 (resident)
            pl.BlockSpec(w2b.shape, lambda p: (0, 0, 0)),    # banded conv2 (resident)
            pl.BlockSpec(params.shape, lambda p: (0, 0)),    # packed BN/PReLU
        ],
        out_specs=pl.BlockSpec((H, l_out), lambda p: (p, 0)),
    )

    return pl.pallas_call(
        _basic_block_kernel,
        out_shape=jax.ShapeDtypeStruct((num_groups * H, l_out), jnp.float32),
        grid_spec=grid_spec,
        compiler_params=pltpu.CompilerParams(dimension_semantics=("parallel",)),
        cost_estimate=pl.CostEstimate(flops=flops, transcendentals=0,
                                      bytes_accessed=bytes_accessed),
    )(x_rows, w1b, w2b, params)


def basic_block_v3(x_nchw, w1, w2, bn1, bn2, bn3, prelu_alpha, *, group=2,
                   matmul_dtype=jnp.bfloat16):
    """bn*: tuples (gamma, beta, running_mean, running_var). Returns NCHW f32."""
    N, Cin, H, W = x_nchw.shape
    Cmid = w1.shape[0]
    Cout = w2.shape[0]
    assert Cout == Cin, "residual add requires out_c2 == in_c1 (downsample=None)"
    G = group if (N % group == 0) else 1     # images packed along the lane axis

    w1b, w2b, params = prepare_block_params(w1, w2, bn1, bn2, bn3, prelu_alpha,
                                            W, G, matmul_dtype=matmul_dtype)

    # NCHW -> lane-dense rows ((N/G)*H, G*W*Cin); G images side-by-side in lanes.
    x = jnp.transpose(x_nchw, (0, 2, 3, 1)).reshape(N // G, G, H, W, Cin)
    x_rows = jnp.transpose(x, (0, 2, 1, 3, 4)).reshape((N // G) * H, G * W * Cin)

    out_rows = basic_block_v3_rows(x_rows, w1b, w2b, params, H=H)

    out = out_rows.reshape(N // G, H, G, W, Cout)
    out = jnp.transpose(out, (0, 2, 1, 3, 4)).reshape(N, H, W, Cout)
    return jnp.transpose(out, (0, 3, 1, 2))                     # NCHW


# --------------------------------------------------------------------------- #
# Pure-JAX reference of the PyTorch forward (for in-script validation)
# --------------------------------------------------------------------------- #
def _reference(x, w1, w2, bn1, bn2, bn3, alpha, *, operand_dtype=jnp.float32):
    """operand_dtype=bf16 mirrors the kernel's matmul-operand rounding exactly."""
    def bn(t, p):
        g, b, m, v = p
        s = g / jnp.sqrt(v + EPS)
        return t * s.reshape(1, -1, 1, 1) + (b - m * s).reshape(1, -1, 1, 1)

    def conv(t, w):
        t = t.astype(operand_dtype).astype(jnp.float32)
        w = w.astype(operand_dtype).astype(jnp.float32)
        return jax.lax.conv_general_dilated(
            t, w, (1, 1), ((1, 1), (1, 1)),
            dimension_numbers=("NCHW", "OIHW", "NCHW"),
            precision=jax.lax.Precision.HIGHEST)

    out = bn(x, bn1)
    out = conv(out, w1)
    out = bn(out, bn2)
    out = jnp.where(out >= 0, out, alpha.reshape(1, -1, 1, 1) * out)
    out = conv(out, w2)
    out = bn(out, bn3)
    return out + x


if __name__ == "__main__":
    key = jax.random.PRNGKey(0)
    N, H, W = 2, 16, 16
    # c_in = (in_c1=4, out_c1=8), c_out = (in_c2=8, out_c2=4), stride=1,
    # downsample=None -> residual add is valid (out_c2 == in_c1).
    Cin, Cmid, Cout = 4, 8, 4
    ks = jax.random.split(key, 8)

    x = jax.random.normal(ks[0], (N, Cin, H, W), jnp.float32)   # NCHW like PyTorch

    w1 = jax.random.normal(ks[1], (Cmid, Cin, 3, 3), jnp.float32) * (2.0 / (Cin * 9)) ** 0.5
    w2 = jax.random.normal(ks[2], (Cout, Cmid, 3, 3), jnp.float32) * (2.0 / (Cmid * 9)) ** 0.5

    def bn_params(k, c):
        k1, k2, k3, k4 = jax.random.split(k, 4)
        gamma = jax.random.uniform(k1, (c,), jnp.float32, 0.5, 1.5)
        beta = jax.random.normal(k2, (c,), jnp.float32) * 0.1
        mean = jax.random.normal(k3, (c,), jnp.float32) * 0.1
        var = jax.random.uniform(k4, (c,), jnp.float32, 0.5, 1.5)
        return gamma, beta, mean, var

    bn1 = bn_params(ks[3], Cin)
    bn2 = bn_params(ks[4], Cmid)
    bn3 = bn_params(ks[5], Cout)
    alpha = jnp.full((Cmid,), 0.25, jnp.float32)   # nn.PReLU default init

    out = jax.block_until_ready(basic_block_v3(x, w1, w2, bn1, bn2, bn3, alpha))
    assert out.shape == (N, Cout, H, W) and out.dtype == jnp.float32

    # Tight check: reference with the SAME bf16 matmul-operand rounding as the
    # kernel.  Any banding / layout / boundary-shift bug shows up at O(0.1+),
    # so this catches real errors while tolerating f32-accumulation-order noise.
    ref_bf16 = _reference(x, w1, w2, bn1, bn2, bn3, alpha,
                          operand_dtype=jnp.bfloat16)
    err_tight = float(jnp.max(jnp.abs(out - ref_bf16)))
    assert err_tight < 3e-2, f"kernel vs bf16-matmul reference: max abs err {err_tight}"

    # Loose check against the exact all-f32 reference: bounds the bf16
    # quantization of the matmul operands only.
    ref_f32 = _reference(x, w1, w2, bn1, bn2, bn3, alpha)
    err_f32 = float(jnp.max(jnp.abs(out - ref_f32)))
    assert err_f32 < 2e-1, f"kernel vs f32 reference: max abs err {err_f32}"

    print("KERNEL_OK")
</pallas_src>

<mosaic_0001>
module attributes {stable_mosaic.version = 11 : i64} {
  func.func @_basic_block_kernel(%arg0: i32, %arg1: memref<16x128xf32, #tpu.memory_space<vmem>>, %arg2: memref<3x128x256xbf16, #tpu.memory_space<vmem>>, %arg3: memref<3x256x128xbf16, #tpu.memory_space<vmem>>, %arg4: memref<8x256xf32, #tpu.memory_space<vmem>>, %arg5: memref<16x128xf32, #tpu.memory_space<vmem>>) attributes {dimension_semantics = [#tpu.dimension_semantics<parallel>], iteration_bounds = array<i64: 1>, scalar_prefetch = 0 : i64, scratch_operands = 0 : i64, tpu.core_type = #tpu.core_type<tc>, window_params = [{transform_indices = @transform_0, window_bounds = array<i64: 16, 128>}, {pipeline_mode = #tpu.pipeline_mode<synchronous>, transform_indices = @transform_1, window_bounds = array<i64: 3, 128, 256>}, {pipeline_mode = #tpu.pipeline_mode<synchronous>, transform_indices = @transform_2, window_bounds = array<i64: 3, 256, 128>}, {pipeline_mode = #tpu.pipeline_mode<synchronous>, transform_indices = @transform_3, window_bounds = array<i64: 8, 256>}, {transform_indices = @transform_4, window_bounds = array<i64: 16, 128>}]} {
    %0 = tpu.iota {dimensions = array<i32: 0>} : vector<16x16xi32>
    %1 = tpu.iota {dimensions = array<i32: 1>} : vector<16x16xi32>
    %c1_i32 = arith.constant 1 : i32
    %2 = vector.broadcast %c1_i32 : i32 to vector<16x16xi32>
    %3 = arith.addi %1, %2 : vector<16x16xi32>
    %4 = arith.cmpi eq, %0, %3 : vector<16x16xi32>
    %cst = arith.constant 1.000000e+00 : f32
    %cst_0 = arith.constant 0.000000e+00 : f32
    %5 = vector.broadcast %cst : f32 to vector<16x16xf32>
    %6 = vector.broadcast %cst_0 : f32 to vector<16x16xf32>
    %7 = arith.select %4, %5, %6 : vector<16x16xi1>, vector<16x16xf32>
    %8 = arith.truncf %7 : vector<16x16xf32> to vector<16x16xbf16>
    %c1_i32_1 = arith.constant 1 : i32
    %9 = vector.broadcast %c1_i32_1 : i32 to vector<16x16xi32>
    %10 = arith.addi %0, %9 : vector<16x16xi32>
    %11 = arith.cmpi eq, %1, %10 : vector<16x16xi32>
    %cst_2 = arith.constant 1.000000e+00 : f32
    %cst_3 = arith.constant 0.000000e+00 : f32
    %12 = vector.broadcast %cst_2 : f32 to vector<16x16xf32>
    %13 = vector.broadcast %cst_3 : f32 to vector<16x16xf32>
    %14 = arith.select %11, %12, %13 : vector<16x16xi1>, vector<16x16xf32>
    %15 = arith.truncf %14 : vector<16x16xf32> to vector<16x16xbf16>
    %c0 = arith.constant 0 : index
    %c0_4 = arith.constant 0 : index
    %16 = vector.load %arg1[%c0, %c0_4] : memref<16x128xf32, #tpu.memory_space<vmem>>, vector<16x128xf32>
    %c0_5 = arith.constant 0 : index
    %c0_6 = arith.constant 0 : index
    %17 = vector.load %arg4[%c0_5, %c0_6] : memref<8x256xf32, #tpu.memory_space<vmem>>, vector<1x128xf32>
    %18 = vector.broadcast %17 : vector<1x128xf32> to vector<16x128xf32>
    %19 = arith.mulf %16, %18 : vector<16x128xf32>
    %c1 = arith.constant 1 : index
    %c0_7 = arith.constant 0 : index
    %20 = vector.load %arg4[%c1, %c0_7] : memref<8x256xf32, #tpu.memory_space<vmem>>, vector<1x128xf32>
    %21 = vector.broadcast %20 : vector<1x128xf32> to vector<16x128xf32>
    %22 = arith.addf %19, %21 : vector<16x128xf32>
    %23 = arith.truncf %22 : vector<16x128xf32> to vector<16x128xbf16>
    %cst_8 = arith.constant dense<0.000000e+00> : vector<16x128xf32>
    %24 = tpu.matmul %8, %23, %cst_8 {dimension_numbers = #tpu.dot_dimension_numbers<[1], [0], [0], [1], [0, 0, 1, 1], [], []>} : vector<16x16xbf16>, vector<16x128xbf16>, vector<16x128xf32> -> vector<16x128xf32>
    %25 = arith.truncf %24 : vector<16x128xf32> to vector<16x128xbf16>
    %cst_9 = arith.constant dense<0.000000e+00> : vector<16x128xf32>
    %26 = tpu.matmul %15, %23, %cst_9 {dimension_numbers = #tpu.dot_dimension_numbers<[1], [0], [0], [1], [0, 0, 1, 1], [], []>} : vector<16x16xbf16>, vector<16x128xbf16>, vector<16x128xf32> -> vector<16x128xf32>
    %27 = arith.truncf %26 : vector<16x128xf32> to vector<16x128xbf16>
    %c0_10 = arith.constant 0 : index
    %c0_11 = arith.constant 0 : index
    %c0_12 = arith.constant 0 : index
    %28 = vector.load %arg2[%c0_10, %c0_11, %c0_12] : memref<3x128x256xbf16, #tpu.memory_space<vmem>>, vector<1x128x256xbf16>
    %29 = vector.shape_cast %28 : vector<1x128x256xbf16> to vector<128x256xbf16>
    %cst_13 = arith.constant dense<0.000000e+00> : vector<16x256xf32>
    %30 = tpu.matmul %25, %29, %cst_13 {dimension_numbers = #tpu.dot_dimension_numbers<[1], [0], [0], [1], [0, 0, 1, 1], [], []>} : vector<16x128xbf16>, vector<128x256xbf16>, vector<16x256xf32> -> vector<16x256xf32>
    %c1_14 = arith.constant 1 : index
    %c0_15 = arith.constant 0 : index
    %c0_16 = arith.constant 0 : index
    %31 = vector.load %arg2[%c1_14, %c0_15, %c0_16] : memref<3x128x256xbf16, #tpu.memory_space<vmem>>, vector<1x128x256xbf16>
    %32 = vector.shape_cast %31 : vector<1x128x256xbf16> to vector<128x256xbf16>
    %cst_17 = arith.constant dense<0.000000e+00> : vector<16x256xf32>
    %33 = tpu.matmul %23, %32, %cst_17 {dimension_numbers = #tpu.dot_dimension_numbers<[1], [0], [0], [1], [0, 0, 1, 1], [], []>} : vector<16x128xbf16>, vector<128x256xbf16>, vector<16x256xf32> -> vector<16x256xf32>
    %34 = arith.addf %30, %33 : vector<16x256xf32>
    %c2 = arith.constant 2 : index
    %c0_18 = arith.constant 0 : index
    %c0_19 = arith.constant 0 : index
    %35 = vector.load %arg2[%c2, %c0_18, %c0_19] : memref<3x128x256xbf16, #tpu.memory_space<vmem>>, vector<1x128x256xbf16>
    %36 = vector.shape_cast %35 : vector<1x128x256xbf16> to vector<128x256xbf16>
    %cst_20 = arith.constant dense<0.000000e+00> : vector<16x256xf32>
    %37 = tpu.matmul %27, %36, %cst_20 {dimension_numbers = #tpu.dot_dimension_numbers<[1], [0], [0], [1], [0, 0, 1, 1], [], []>} : vector<16x128xbf16>, vector<128x256xbf16>, vector<16x256xf32> -> vector<16x256xf32>
    %38 = arith.addf %34, %37 : vector<16x256xf32>
    %c2_21 = arith.constant 2 : index
    %c0_22 = arith.constant 0 : index
    %39 = vector.load %arg4[%c2_21, %c0_22] : memref<8x256xf32, #tpu.memory_space<vmem>>, vector<1x256xf32>
    %40 = vector.broadcast %39 : vector<1x256xf32> to vector<16x256xf32>
    %41 = arith.mulf %38, %40 : vector<16x256xf32>
    %c3 = arith.constant 3 : index
    %c0_23 = arith.constant 0 : index
    %42 = vector.load %arg4[%c3, %c0_23] : memref<8x256xf32, #tpu.memory_space<vmem>>, vector<1x256xf32>
    %43 = vector.broadcast %42 : vector<1x256xf32> to vector<16x256xf32>
    %44 = arith.addf %41, %43 : vector<16x256xf32>
    %cst_24 = arith.constant 0.000000e+00 : f32
    %45 = vector.broadcast %cst_24 : f32 to vector<16x256xf32>
    %46 = arith.cmpf oge, %44, %45 : vector<16x256xf32>
    %c4 = arith.constant 4 : index
    %c0_25 = arith.constant 0 : index
    %47 = vector.load %arg4[%c4, %c0_25] : memref<8x256xf32, #tpu.memory_space<vmem>>, vector<1x256xf32>
    %48 = vector.broadcast %47 : vector<1x256xf32> to vector<16x256xf32>
    %49 = arith.mulf %48, %44 : vector<16x256xf32>
    %50 = arith.select %46, %44, %49 : vector<16x256xi1>, vector<16x256xf32>
    %51 = arith.truncf %50 : vector<16x256xf32> to vector<16x256xbf16>
    %cst_26 = arith.constant dense<0.000000e+00> : vector<16x256xf32>
    %52 = tpu.matmul %8, %51, %cst_26 {dimension_numbers = #tpu.dot_dimension_numbers<[1], [0], [0], [1], [0, 0, 1, 1], [], []>} : vector<16x16xbf16>, vector<16x256xbf16>, vector<16x256xf32> -> vector<16x256xf32>
    %53 = arith.truncf %52 : vector<16x256xf32> to vector<16x256xbf16>
    %cst_27 = arith.constant dense<0.000000e+00> : vector<16x256xf32>
    %54 = tpu.matmul %15, %51, %cst_27 {dimension_numbers = #tpu.dot_dimension_numbers<[1], [0], [0], [1], [0, 0, 1, 1], [], []>} : vector<16x16xbf16>, vector<16x256xbf16>, vector<16x256xf32> -> vector<16x256xf32>
    %55 = arith.truncf %54 : vector<16x256xf32> to vector<16x256xbf16>
    %c0_28 = arith.constant 0 : index
    %c0_29 = arith.constant 0 : index
    %c0_30 = arith.constant 0 : index
    %56 = vector.load %arg3[%c0_28, %c0_29, %c0_30] : memref<3x256x128xbf16, #tpu.memory_space<vmem>>, vector<1x256x128xbf16>
    %57 = vector.shape_cast %56 : vector<1x256x128xbf16> to vector<256x128xbf16>
    %cst_31 = arith.constant dense<0.000000e+00> : vector<16x128xf32>
    %58 = tpu.matmul %53, %57, %cst_31 {dimension_numbers = #tpu.dot_dimension_numbers<[1], [0], [0], [1], [0, 0, 1, 1], [], []>} : vector<16x256xbf16>, vector<256x128xbf16>, vector<16x128xf32> -> vector<16x128xf32>
    %c1_32 = arith.constant 1 : index
    %c0_33 = arith.constant 0 : index
    %c0_34 = arith.constant 0 : index
    %59 = vector.load %arg3[%c1_32, %c0_33, %c0_34] : memref<3x256x128xbf16, #tpu.memory_space<vmem>>, vector<1x256x128xbf16>
    %60 = vector.shape_cast %59 : vector<1x256x128xbf16> to vector<256x128xbf16>
    %cst_35 = arith.constant dense<0.000000e+00> : vector<16x128xf32>
    %61 = tpu.matmul %51, %60, %cst_35 {dimension_numbers = #tpu.dot_dimension_numbers<[1], [0], [0], [1], [0, 0, 1, 1], [], []>} : vector<16x256xbf16>, vector<256x128xbf16>, vector<16x128xf32> -> vector<16x128xf32>
    %62 = arith.addf %58, %61 : vector<16x128xf32>
    %c2_36 = arith.constant 2 : index
    %c0_37 = arith.constant 0 : index
    %c0_38 = arith.constant 0 : index
    %63 = vector.load %arg3[%c2_36, %c0_37, %c0_38] : memref<3x256x128xbf16, #tpu.memory_space<vmem>>, vector<1x256x128xbf16>
    %64 = vector.shape_cast %63 : vector<1x256x128xbf16> to vector<256x128xbf16>
    %cst_39 = arith.constant dense<0.000000e+00> : vector<16x128xf32>
    %65 = tpu.matmul %55, %64, %cst_39 {dimension_numbers = #tpu.dot_dimension_numbers<[1], [0], [0], [1], [0, 0, 1, 1], [], []>} : vector<16x256xbf16>, vector<256x128xbf16>, vector<16x128xf32> -> vector<16x128xf32>
    %66 = arith.addf %62, %65 : vector<16x128xf32>
    %c5 = arith.constant 5 : index
    %c0_40 = arith.constant 0 : index
    %67 = vector.load %arg4[%c5, %c0_40] : memref<8x256xf32, #tpu.memory_space<vmem>>, vector<1x128xf32>
    %68 = vector.broadcast %67 : vector<1x128xf32> to vector<16x128xf32>
    %69 = arith.mulf %66, %68 : vector<16x128xf32>
    %c6 = arith.constant 6 : index
    %c0_41 = arith.constant 0 : index
    %70 = vector.load %arg4[%c6, %c0_41] : memref<8x256xf32, #tpu.memory_space<vmem>>, vector<1x128xf32>
    %71 = vector.broadcast %70 : vector<1x128xf32> to vector<16x128xf32>
    %72 = arith.addf %69, %71 : vector<16x128xf32>
    %73 = arith.addf %72, %16 : vector<16x128xf32>
    %c0_42 = arith.constant 0 : index
    %c0_43 = arith.constant 0 : index
    %74 = vector.load %arg5[%c0_42, %c0_43] : memref<16x128xf32, #tpu.memory_space<vmem>>, vector<16x128xf32>
    tpu.vector_store %arg5[%c0_42, %c0_43], %73 {strides = array<i32>} : memref<16x128xf32, #tpu.memory_space<vmem>>, vector<16x128xf32>,
    return
  }
  func.func @transform_0(%arg0: i32) -> (i32, i32) {
    %c0_i32 = arith.constant 0 : i32
    %c0_i32_0 = arith.constant 0 : i32
    return %arg0, %c0_i32 : i32, i32
  }
  func.func @transform_1(%arg0: i32) -> (i32, i32, i32) {
    %c0_i32 = arith.constant 0 : i32
    %c0_i32_0 = arith.constant 0 : i32
    %c0_i32_1 = arith.constant 0 : i32
    %c0_i32_2 = arith.constant 0 : i32
    return %c0_i32, %c0_i32_0, %c0_i32_1 : i32, i32, i32
  }
  func.func @transform_2(%arg0: i32) -> (i32, i32, i32) {
    %c0_i32 = arith.constant 0 : i32
    %c0_i32_0 = arith.constant 0 : i32
    %c0_i32_1 = arith.constant 0 : i32
    %c0_i32_2 = arith.constant 0 : i32
    return %c0_i32, %c0_i32_0, %c0_i32_1 : i32, i32, i32
  }
  func.func @transform_3(%arg0: i32) -> (i32, i32) {
    %c0_i32 = arith.constant 0 : i32
    %c0_i32_0 = arith.constant 0 : i32
    %c0_i32_1 = arith.constant 0 : i32
    return %c0_i32, %c0_i32_0 : i32, i32
  }
  func.func @transform_4(%arg0: i32) -> (i32, i32) {
    %c0_i32 = arith.constant 0 : i32
    %c0_i32_0 = arith.constant 0 : i32
    return %arg0, %c0_i32 : i32, i32
  }
}

</mosaic_0001>

<llo_original>
// kernel: tpu_custom_call.1
$region0: #{tpu_custom_call.1}
  #allocation0 [shape = 'u32[]', space=smem, size = 0x4, offset = 0x4, fixed_abs, tag = 'smem constant byte address 0x4 - core index']
  #allocation1 [shape = 'u32[144,128]{1,0:T(1,128)}', space=vmem, size = 0x12000, scoped, tag = 'internal scratch']
  %s0 = inlined_call_operand.hbm [shape: f32[16,128], index: 0, kind: input, shape index: {}]
  %s1 = inlined_call_operand.hbm [shape: bf16[3,128,256], index: 1, kind: input, shape index: {}]
  %s2 = inlined_call_operand.hbm [shape: bf16[3,256,128], index: 2, kind: input, shape index: {}]
  %s3 = inlined_call_operand.hbm [shape: f32[8,256], index: 3, kind: input, shape index: {}]
  %s4 = inlined_call_operand.hbm [shape: f32[16,128], index: 4, kind: output, shape index: {}]
  %s5 = sld [smem:[#allocation0]]
  $region42: #{tpu_custom_call.1} parent=0
    _
  %s7 = ssub.s32 1, %s5
  %s8 = scalar_select 0, %s7, %s5
  $region1: #{tpu_custom_call.1} parent=0
    #allocation2 [shape = 'u8[8192]{0}', space=vmem, size = 0x2000, scoped, tag = 'input window, operand 0, single buffered']
    #allocation3 [shape = 's32[1]{0}', space=sflag, size = 0x4, scoped, tag = 'scoped memory for tpu_custom_call.1']
    #allocation4 [shape = 's32[1]{0}', space=sflag, size = 0x4, scoped, tag = 'scoped memory for tpu_custom_call.1']
    #allocation5 [shape = 'u8[196608]{0}', space=vmem, size = 0x30000, scoped, tag = 'input window, operand 1, single buffered']
    #allocation6 [shape = 's32[1]{0}', space=sflag, size = 0x4, scoped, tag = 'scoped memory for tpu_custom_call.1']
    #allocation7 [shape = 'u8[196608]{0}', space=vmem, size = 0x30000, scoped, tag = 'input window, operand 2, single buffered']
    #allocation8 [shape = 'u8[8192]{0}', space=vmem, size = 0x2000, scoped, tag = 'input window, operand 3, single buffered']
    #allocation9 [shape = 's32[1]{0}', space=sflag, size = 0x4, scoped, tag = 'scoped memory for tpu_custom_call.1']
    #allocation10 [shape = 'u8[8192]{0}', space=vmem, size = 0x2000, scoped, tag = 'output window, operand 0, single buffered']
    %9 = vsyncpa [#allocation3], 0
    %10 = vsyncpa [#allocation6], 0
    %11 = vsyncpa [#allocation9], 0
    %12 = vsyncpa [#allocation4], 0
    // Predicated region
    $region2: #{tpu_custom_call.1} parent=1 // pred_check
      _
    $region3: #{tpu_custom_call.1} parent=1 // pred_check_branch
      %14 = sbr.rel (0) target = $region5
    $region4: #{tpu_custom_call.1} parent=1 // pred_region
      %s16 = ssub.s32 256, 256
      %17 = vsyncadd [#allocation3], %s16
      %s18 = sshll.u32 [#allocation2], 4
      %s19 = int_to_ptr.vmem [resolvable:$true] %s18
      %24 = dma.hbm_to_vmem [thread:$0]  %s0, 256, %s19, [#allocation3], 128, 128, 8
    $region5: #{tpu_custom_call.1} parent=1 // pred_fallthru
      _
    // Predicated region
    $region6: #{tpu_custom_call.1} parent=1 // pred_check
      _
    $region7: #{tpu_custom_call.1} parent=1 // pred_check_branch
      %26 = sbr.rel (0) target = $region9
    $region8: #{tpu_custom_call.1} parent=1 // pred_region
      %s28 = ssub.s32 6144, 6144
      %29 = vsyncadd [#allocation6], %s28
      %s30 = sshll.u32 [#allocation5], 4
      %s31 = int_to_ptr.vmem [resolvable:$true] %s30
      %36 = dma.hbm_to_vmem [thread:$0]  %s1, 6144, %s31, [#allocation6], 128, 128, 8
    $region9: #{tpu_custom_call.1} parent=1 // pred_fallthru
      _
    // Predicated region
    $region10: #{tpu_custom_call.1} parent=1 // pred_check
      _
    $region11: #{tpu_custom_call.1} parent=1 // pred_check_branch
      %38 = sbr.rel (0) target = $region13
    $region12: #{tpu_custom_call.1} parent=1 // pred_region
      %s40 = ssub.s32 6144, 6144
      %41 = vsyncadd [#allocation6], %s40
      %s42 = sshll.u32 [#allocation7], 4
      %s43 = int_to_ptr.vmem [resolvable:$true] %s42
      %48 = dma.hbm_to_vmem [thread:$0]  %s2, 6144, %s43, [#allocation6], 64, 64, 4
    $region13: #{tpu_custom_call.1} parent=1 // pred_fallthru
      _
    // Predicated region
    $region14: #{tpu_custom_call.1} parent=1 // pred_check
      _
    $region15: #{tpu_custom_call.1} parent=1 // pred_check_branch
      %50 = sbr.rel (0) target = $region17
    $region16: #{tpu_custom_call.1} parent=1 // pred_region
      %s52 = ssub.s32 256, 256
      %53 = vsyncadd [#allocation9], %s52
      %s55 = sshll.u32 [#allocation8], 4
      %s56 = int_to_ptr.vmem [resolvable:$true] %s55
      %58 = dma.hbm_to_vmem [thread:$0]  %s3, 256, %s56, [#allocation9]
    $region17: #{tpu_custom_call.1} parent=1 // pred_fallthru
      _
    // Predicated region
    $region18: #{tpu_custom_call.1} parent=1 // pred_check
      _
    $region19: #{tpu_custom_call.1} parent=1 // pred_check_branch
      %60 = sbr.rel (0) target = $region21
    $region20: #{tpu_custom_call.1} parent=1 // pred_region
      %61 = dma.done [#allocation3], 256
    $region21: #{tpu_custom_call.1} parent=1 // pred_fallthru
      _
    // Predicated region
    $region22: #{tpu_custom_call.1} parent=1 // pred_check
      _
    $region23: #{tpu_custom_call.1} parent=1 // pred_check_branch
      %63 = sbr.rel (0) target = $region25
    $region24: #{tpu_custom_call.1} parent=1 // pred_region
      %64 = dma.done [#allocation6], 6144
    $region25: #{tpu_custom_call.1} parent=1 // pred_fallthru
      _
    // Predicated region
    $region26: #{tpu_custom_call.1} parent=1 // pred_check
      _
    $region27: #{tpu_custom_call.1} parent=1 // pred_check_branch
      %66 = sbr.rel (0) target = $region29
    $region28: #{tpu_custom_call.1} parent=1 // pred_region
      %67 = dma.done [#allocation6], 6144
    $region29: #{tpu_custom_call.1} parent=1 // pred_fallthru
      _
    // Predicated region
    $region30: #{tpu_custom_call.1} parent=1 // pred_check
      _
    $region31: #{tpu_custom_call.1} parent=1 // pred_check_branch
      %69 = sbr.rel (0) target = $region33
    $region32: #{tpu_custom_call.1} parent=1 // pred_region
      %70 = dma.done [#allocation9], 256
    $region33: #{tpu_custom_call.1} parent=1 // pred_fallthru
      _
    %v72 = vlaneseq
    %v73 = vshrl.u32 %v72, 7
    %v74 = vadd.s32 %v73, 8
    %v75 = vlaneseq
    %v76 = vand.u32 %v75, 127
    %v77 = vadd.s32 %v76, 1
    %vm78 = vcmp.eq.s32.totalorder %v73, %v77
    %vm79 = vcmp.eq.s32.totalorder %v74, %v77
    %v80 = vsel %vm78, 1.0, 0.0
    %v81 = vsel %vm79, 1.0, 0.0
    %v82 = vpack.c.bf16 %v81, %v80
    %v83 = vadd.s32 %v73, 1
    %v84 = vadd.s32 %v74, 1
    %vm85 = vcmp.eq.s32.totalorder %v76, %v83
    %vm86 = vcmp.eq.s32.totalorder %v76, %v84
    %v87 = vsel %vm85, 1.0, 0.0
    %v88 = vsel %vm86, 1.0, 0.0
    %v89 = vpack.c.bf16 %v88, %v87
    %v90 = vld [vmem:[#allocation2] sm:$0xff]
    %v91 = vld [vmem:[#allocation2 + $0x8] sm:$0xff]
    %v92 = vld [vmem:[#allocation8] ss:$0 sm:$0xff]
    %v93 = vmul.f32 %v90, %v92
    %v94 = vmul.f32 %v91, %v92
    %v95 = vld [vmem:[#allocation8 + $0x1] ss:$0 sm:$0xff]
    %v96 = vadd.f32 %v93, %v95
    %v97 = vadd.f32 %v94, %v95
    %v98 = vpack.c.bf16 %v97, %v96
    %vm99 = vcmask 130048
    %v101 = vsel %vm99, %v82, 0
    %103 = vmatprep.subr.bf16.mxu0 0
    %104 = vmatpush1.bf16.msra.mxu0 %v98
    %105 = vmatprep.subr.bf16.mxu0 0
    %106 = vmatpush1.bf16.msra.mxu0 0
    %107 = vmatprep.subr.bf16.mxu0 0
    %108 = vmatpush1.bf16.msra.mxu0 0
    %109 = vmatprep.subr.bf16.mxu0 0
    %110 = vmatpush1.bf16.msra.mxu0 0
    %111 = vmatprep.subr.bf16.mxu0 0
    %112 = vmatpush1.bf16.msra.mxu0 0
    %113 = vmatprep.subr.bf16.mxu0 0
    %114 = vmatpush1.bf16.msra.mxu0 0
    %115 = vmatprep.subr.bf16.mxu0 0
    %116 = vmatpush1.bf16.msra.mxu0 0
    %117 = vmatprep.subr.bf16.mxu0 0
    %118 = vmatpush1.bf16.msra.mxu0 0
    %119 = vmatprep.subr.bf16.mxu0 0
    %120 = vmatpush1.bf16.msra.mxu0 0
    %121 = vmatprep.subr.bf16.mxu0 0
    %122 = vmatpush1.bf16.msra.mxu0 0
    %123 = vmatprep.subr.bf16.mxu0 0
    %124 = vmatpush1.bf16.msra.mxu0 0
    %125 = vmatprep.subr.bf16.mxu0 0
    %126 = vmatpush1.bf16.msra.mxu0 0
    %127 = vmatprep.subr.bf16.mxu0 0
    %128 = vmatpush1.bf16.msra.mxu0 0
    %129 = vmatprep.subr.bf16.mxu0 0
    %130 = vmatpush1.bf16.msra.mxu0 0
    %131 = vmatprep.subr.bf16.mxu0 0
    %132 = vmatpush1.bf16.msra.mxu0 0
    %133 = vmatprep.subr.bf16.mxu0 0
    %134 = vmatpush1.bf16.msra.mxu0 0
    %135 = vmatprep.mubr.bf16.mxu0 0
    %136 = vmatmul.mubr.bf16.gmra.mrb[0].mxu0 %v101
    %v137 = vpop.f32.mrb[0].mxu0
    %v138 = vadd.f32 0.0, %v137
    %v139 = vpop.f32.mrb[0].mxu0
    %v140 = vpop.f32.mrb[0].mxu0
    %v141 = vadd.f32 0.0, %v140
    %v142 = vpop.f32.mrb[0].mxu0
    %143 = vdwg.mxu0
    %v144 = vpack.c.bf16 %v141, %v138
    %v146 = vsel %vm99, %v89, 0
    %148 = vmatprep.subr.bf16.mxu0 0
    %149 = vmatpush1.bf16.msra.mxu0 %v98
    %150 = vmatprep.subr.bf16.mxu0 0
    %151 = vmatpush1.bf16.msra.mxu0 0
    %152 = vmatprep.subr.bf16.mxu0 0
    %153 = vmatpush1.bf16.msra.mxu0 0
    %154 = vmatprep.subr.bf16.mxu0 0
    %155 = vmatpush1.bf16.msra.mxu0 0
    %156 = vmatprep.subr.bf16.mxu0 0
    %157 = vmatpush1.bf16.msra.mxu0 0
    %158 = vmatprep.subr.bf16.mxu0 0
    %159 = vmatpush1.bf16.msra.mxu0 0
    %160 = vmatprep.subr.bf16.mxu0 0
    %161 = vmatpush1.bf16.msra.mxu0 0
    %162 = vmatprep.subr.bf16.mxu0 0
    %163 = vmatpush1.bf16.msra.mxu0 0
    %164 = vmatprep.subr.bf16.mxu0 0
    %165 = vmatpush1.bf16.msra.mxu0 0
    %166 = vmatprep.subr.bf16.mxu0 0
    %167 = vmatpush1.bf16.msra.mxu0 0
    %168 = vmatprep.subr.bf16.mxu0 0
    %169 = vmatpush1.bf16.msra.mxu0 0
    %170 = vmatprep.subr.bf16.mxu0 0
    %171 = vmatpush1.bf16.msra.mxu0 0
    %172 = vmatprep.subr.bf16.mxu0 0
    %173 = vmatpush1.bf16.msra.mxu0 0
    %174 = vmatprep.subr.bf16.mxu0 0
    %175 = vmatpush1.bf16.msra.mxu0 0
    %176 = vmatprep.subr.bf16.mxu0 0
    %177 = vmatpush1.bf16.msra.mxu0 0
    %178 = vmatprep.subr.bf16.mxu0 0
    %179 = vmatpush1.bf16.msra.mxu0 0
    %180 = vmatprep.mubr.bf16.mxu0 0
    %181 = vmatmul.mubr.bf16.gmra.mrb[0].mxu0 %v146
    %v182 = vpop.f32.mrb[0].mxu0
    %v183 = vadd.f32 0.0, %v182
    %v184 = vpop.f32.mrb[0].mxu0
    %v185 = vpop.f32.mrb[0].mxu0
    %v186 = vadd.f32 0.0, %v185
    %v187 = vpop.f32.mrb[0].mxu0
    %188 = vdwg.mxu0
    %v189 = vpack.c.bf16 %v186, %v183
    %v190 = vld [vmem:[#allocation5] sm:$0xff]
    %v191 = vld [vmem:[#allocation5 + $0x8] sm:$0xff]
    %v192 = vld [vmem:[#allocation5 + $0x10] sm:$0xff]
    %v193 = vld [vmem:[#allocation5 + $0x18] sm:$0xff]
    %v194 = vld [vmem:[#allocation5 + $0x20] sm:$0xff]
    %v195 = vld [vmem:[#allocation5 + $0x28] sm:$0xff]
    %v196 = vld [vmem:[#allocation5 + $0x30] sm:$0xff]
    %v197 = vld [vmem:[#allocation5 + $0x38] sm:$0xff]
    %v198 = vld [vmem:[#allocation5 + $0x40] sm:$0xff]
    %v199 = vld [vmem:[#allocation5 + $0x48] sm:$0xff]
    %v200 = vld [vmem:[#allocation5 + $0x50] sm:$0xff]
    %v201 = vld [vmem:[#allocation5 + $0x58] sm:$0xff]
    %v202 = vld [vmem:[#allocation5 + $0x60] sm:$0xff]
    %v203 = vld [vmem:[#allocation5 + $0x68] sm:$0xff]
    %v204 = vld [vmem:[#allocation5 + $0x70] sm:$0xff]
    %v205 = vld [vmem:[#allocation5 + $0x78] sm:$0xff]
    %s206 = scalar_lea.vmem [#allocation5], 128
    %v207 = vld [vmem:[%s206] sm:$0xff]
    %v208 = vld [vmem:[%s206 + $0x8] sm:$0xff]
    %v209 = vld [vmem:[%s206 + $0x10] sm:$0xff]
    %v210 = vld [vmem:[%s206 + $0x18] sm:$0xff]
    %v211 = vld [vmem:[%s206 + $0x20] sm:$0xff]
    %v212 = vld [vmem:[%s206 + $0x28] sm:$0xff]
    %v213 = vld [vmem:[%s206 + $0x30] sm:$0xff]
    %v214 = vld [vmem:[%s206 + $0x38] sm:$0xff]
    %v215 = vld [vmem:[%s206 + $0x40] sm:$0xff]
    %v216 = vld [vmem:[%s206 + $0x48] sm:$0xff]
    %v217 = vld [vmem:[%s206 + $0x50] sm:$0xff]
    %v218 = vld [vmem:[%s206 + $0x58] sm:$0xff]
    %v219 = vld [vmem:[%s206 + $0x60] sm:$0xff]
    %v220 = vld [vmem:[%s206 + $0x68] sm:$0xff]
    %v221 = vld [vmem:[%s206 + $0x70] sm:$0xff]
    %v222 = vld [vmem:[%s206 + $0x78] sm:$0xff]
    %v239 = vunpack.c.l.b16 %v207
    %v240 = vunpack.c.h.b16 %v207
    %v241 = vunpack.c.l.b16 %v208
    %v242 = vunpack.c.h.b16 %v208
    %v243 = vunpack.c.l.b16 %v209
    %v244 = vunpack.c.h.b16 %v209
    %v245 = vunpack.c.l.b16 %v210
    %v246 = vunpack.c.h.b16 %v210
    %v247 = vunpack.c.l.b16 %v211
    %v248 = vunpack.c.h.b16 %v211
    %v249 = vunpack.c.l.b16 %v212
    %v250 = vunpack.c.h.b16 %v212
    %v251 = vunpack.c.l.b16 %v213
    %v252 = vunpack.c.h.b16 %v213
    %v253 = vunpack.c.l.b16 %v214
    %v254 = vunpack.c.h.b16 %v214
    %v255 = vunpack.c.l.b16 %v215
    %v256 = vunpack.c.h.b16 %v215
    %v257 = vunpack.c.l.b16 %v216
    %v258 = vunpack.c.h.b16 %v216
    %v259 = vunpack.c.l.b16 %v217
    %v260 = vunpack.c.h.b16 %v217
    %v261 = vunpack.c.l.b16 %v218
    %v262 = vunpack.c.h.b16 %v218
    %v263 = vunpack.c.l.b16 %v219
    %v264 = vunpack.c.h.b16 %v219
    %v265 = vunpack.c.l.b16 %v220
    %v266 = vunpack.c.h.b16 %v220
    %v267 = vunpack.c.l.b16 %v221
    %v268 = vunpack.c.h.b16 %v221
    %v269 = vunpack.c.l.b16 %v222
    %v270 = vunpack.c.h.b16 %v222
    %v271 = vpack.c.b16 %v241, %v239
    %v272 = vpack.c.b16 %v242, %v240
    %v273 = vpack.c.b16 %v245, %v243
    %v274 = vpack.c.b16 %v246, %v244
    %v275 = vpack.c.b16 %v249, %v247
    %v276 = vpack.c.b16 %v250, %v248
    %v277 = vpack.c.b16 %v253, %v251
    %v278 = vpack.c.b16 %v254, %v252
    %v279 = vpack.c.b16 %v257, %v255
    %v280 = vpack.c.b16 %v258, %v256
    %v281 = vpack.c.b16 %v261, %v259
    %v282 = vpack.c.b16 %v262, %v260
    %v283 = vpack.c.b16 %v265, %v263
    %v284 = vpack.c.b16 %v266, %v264
    %v285 = vpack.c.b16 %v269, %v267
    %v286 = vpack.c.b16 %v270, %v268
    %303 = vmatprep.subr.bf16.mxu0 %v272
    %304 = vmatpush1.bf16.msra.mxu0 %v271
    %305 = vmatprep.subr.bf16.mxu0 %v274
    %306 = vmatpush1.bf16.msra.mxu0 %v273
    %307 = vmatprep.subr.bf16.mxu0 %v276
    %308 = vmatpush1.bf16.msra.mxu0 %v275
    %309 = vmatprep.subr.bf16.mxu0 %v278
    %310 = vmatpush1.bf16.msra.mxu0 %v277
    %311 = vmatprep.subr.bf16.mxu0 %v280
    %312 = vmatpush1.bf16.msra.mxu0 %v279
    %313 = vmatprep.subr.bf16.mxu0 %v282
    %314 = vmatpush1.bf16.msra.mxu0 %v281
    %315 = vmatprep.subr.bf16.mxu0 %v284
    %316 = vmatpush1.bf16.msra.mxu0 %v283
    %317 = vmatprep.subr.bf16.mxu0 %v286
    %318 = vmatpush1.bf16.msra.mxu0 %v285
    %319 = vmatprep.subr.bf16.mxu0 0
    %320 = vmatpush1.bf16.msra.mxu0 0
    %321 = vmatprep.subr.bf16.mxu0 0
    %322 = vmatpush1.bf16.msra.mxu0 0
    %323 = vmatprep.subr.bf16.mxu0 0
    %324 = vmatpush1.bf16.msra.mxu0 0
    %325 = vmatprep.subr.bf16.mxu0 0
    %326 = vmatpush1.bf16.msra.mxu0 0
    %327 = vmatprep.subr.bf16.mxu0 0
    %328 = vmatpush1.bf16.msra.mxu0 0
    %329 = vmatprep.subr.bf16.mxu0 0
    %330 = vmatpush1.bf16.msra.mxu0 0
    %331 = vmatprep.subr.bf16.mxu0 0
    %332 = vmatpush1.bf16.msra.mxu0 0
    %333 = vmatprep.subr.bf16.mxu0 0
    %334 = vmatpush1.bf16.msra.mxu0 0
    %335 = vmatprep.mubr.bf16.mxu0 0
    %336 = vmatmul.mubr.bf16.gmra.mrb[0].mxu0 %v98
    %v337 = vpop.f32.mrb[0].mxu0
    %v338 = vadd.f32 0.0, %v337
    %v339 = vpop.f32.mrb[0].mxu0
    %v340 = vadd.f32 0.0, %v339
    %v341 = vpop.f32.mrb[0].mxu0
    %v342 = vadd.f32 0.0, %v341
    %v343 = vpop.f32.mrb[0].mxu0
    %v344 = vadd.f32 0.0, %v343
    %345 = vdwg.mxu0
    %v362 = vunpack.c.l.b16 %v190
    %v363 = vunpack.c.h.b16 %v190
    %v364 = vunpack.c.l.b16 %v191
    %v365 = vunpack.c.h.b16 %v191
    %v366 = vunpack.c.l.b16 %v192
    %v367 = vunpack.c.h.b16 %v192
    %v368 = vunpack.c.l.b16 %v193
    %v369 = vunpack.c.h.b16 %v193
    %v370 = vunpack.c.l.b16 %v194
    %v371 = vunpack.c.h.b16 %v194
    %v372 = vunpack.c.l.b16 %v195
    %v373 = vunpack.c.h.b16 %v195
    %v374 = vunpack.c.l.b16 %v196
    %v375 = vunpack.c.h.b16 %v196
    %v376 = vunpack.c.l.b16 %v197
    %v377 = vunpack.c.h.b16 %v197
    %v378 = vunpack.c.l.b16 %v198
    %v379 = vunpack.c.h.b16 %v198
    %v380 = vunpack.c.l.b16 %v199
    %v381 = vunpack.c.h.b16 %v199
    %v382 = vunpack.c.l.b16 %v200
    %v383 = vunpack.c.h.b16 %v200
    %v384 = vunpack.c.l.b16 %v201
    %v385 = vunpack.c.h.b16 %v201
    %v386 = vunpack.c.l.b16 %v202
    %v387 = vunpack.c.h.b16 %v202
    %v388 = vunpack.c.l.b16 %v203
    %v389 = vunpack.c.h.b16 %v203
    %v390 = vunpack.c.l.b16 %v204
    %v391 = vunpack.c.h.b16 %v204
    %v392 = vunpack.c.l.b16 %v205
    %v393 = vunpack.c.h.b16 %v205
    %v394 = vpack.c.b16 %v364, %v362
    %v395 = vpack.c.b16 %v365, %v363
    %v396 = vpack.c.b16 %v368, %v366
    %v397 = vpack.c.b16 %v369, %v367
    %v398 = vpack.c.b16 %v372, %v370
    %v399 = vpack.c.b16 %v373, %v371
    %v400 = vpack.c.b16 %v376, %v374
    %v401 = vpack.c.b16 %v377, %v375
    %v402 = vpack.c.b16 %v380, %v378
    %v403 = vpack.c.b16 %v381, %v379
    %v404 = vpack.c.b16 %v384, %v382
    %v405 = vpack.c.b16 %v385, %v383
    %v406 = vpack.c.b16 %v388, %v386
    %v407 = vpack.c.b16 %v389, %v387
    %v408 = vpack.c.b16 %v392, %v390
    %v409 = vpack.c.b16 %v393, %v391
    %426 = vmatprep.subr.bf16.mxu0 %v395
    %427 = vmatpush1.bf16.msra.mxu0 %v394
    %428 = vmatprep.subr.bf16.mxu0 %v397
    %429 = vmatpush1.bf16.msra.mxu0 %v396
    %430 = vmatprep.subr.bf16.mxu0 %v399
    %431 = vmatpush1.bf16.msra.mxu0 %v398
    %432 = vmatprep.subr.bf16.mxu0 %v401
    %433 = vmatpush1.bf16.msra.mxu0 %v400
    %434 = vmatprep.subr.bf16.mxu0 %v403
    %435 = vmatpush1.bf16.msra.mxu0 %v402
    %436 = vmatprep.subr.bf16.mxu0 %v405
    %437 = vmatpush1.bf16.msra.mxu0 %v404
    %438 = vmatprep.subr.bf16.mxu0 %v407
    %439 = vmatpush1.bf16.msra.mxu0 %v406
    %440 = vmatprep.subr.bf16.mxu0 %v409
    %441 = vmatpush1.bf16.msra.mxu0 %v408
    %442 = vmatprep.subr.bf16.mxu0 0
    %443 = vmatpush1.bf16.msra.mxu0 0
    %444 = vmatprep.subr.bf16.mxu0 0
    %445 = vmatpush1.bf16.msra.mxu0 0
    %446 = vmatprep.subr.bf16.mxu0 0
    %447 = vmatpush1.bf16.msra.mxu0 0
    %448 = vmatprep.subr.bf16.mxu0 0
    %449 = vmatpush1.bf16.msra.mxu0 0
    %450 = vmatprep.subr.bf16.mxu0 0
    %451 = vmatpush1.bf16.msra.mxu0 0
    %452 = vmatprep.subr.bf16.mxu0 0
    %453 = vmatpush1.bf16.msra.mxu0 0
    %454 = vmatprep.subr.bf16.mxu0 0
    %455 = vmatpush1.bf16.msra.mxu0 0
    %456 = vmatprep.subr.bf16.mxu0 0
    %457 = vmatpush1.bf16.msra.mxu0 0
    %458 = vmatprep.mubr.bf16.mxu0 0
    %459 = vmatmul.mubr.bf16.gmra.mrb[0].mxu0 %v144
    %v460 = vpop.f32.mrb[0].mxu0
    %v461 = vadd.f32 %v338, %v460
    %v462 = vpop.f32.mrb[0].mxu0
    %v463 = vadd.f32 %v340, %v462
    %v464 = vpop.f32.mrb[0].mxu0
    %v465 = vadd.f32 %v342, %v464
    %v466 = vpop.f32.mrb[0].mxu0
    %v467 = vadd.f32 %v344, %v466
    %468 = vdwg.mxu0
    %s469 = scalar_lea.vmem [#allocation5], 256
    %v470 = vld [vmem:[%s469] sm:$0xff]
    %v471 = vld [vmem:[%s469 + $0x8] sm:$0xff]
    %v472 = vld [vmem:[%s469 + $0x10] sm:$0xff]
    %v473 = vld [vmem:[%s469 + $0x18] sm:$0xff]
    %v474 = vld [vmem:[%s469 + $0x20] sm:$0xff]
    %v475 = vld [vmem:[%s469 + $0x28] sm:$0xff]
    %v476 = vld [vmem:[%s469 + $0x30] sm:$0xff]
    %v477 = vld [vmem:[%s469 + $0x38] sm:$0xff]
    %v478 = vld [vmem:[%s469 + $0x40] sm:$0xff]
    %v479 = vld [vmem:[%s469 + $0x48] sm:$0xff]
    %v480 = vld [vmem:[%s469 + $0x50] sm:$0xff]
    %v481 = vld [vmem:[%s469 + $0x58] sm:$0xff]
    %v482 = vld [vmem:[%s469 + $0x60] sm:$0xff]
    %v483 = vld [vmem:[%s469 + $0x68] sm:$0xff]
    %v484 = vld [vmem:[%s469 + $0x70] sm:$0xff]
    %v485 = vld [vmem:[%s469 + $0x78] sm:$0xff]
    %v502 = vunpack.c.l.b16 %v470
    %v503 = vunpack.c.h.b16 %v470
    %v504 = vunpack.c.l.b16 %v471
    %v505 = vunpack.c.h.b16 %v471
    %v506 = vunpack.c.l.b16 %v472
    %v507 = vunpack.c.h.b16 %v472
    %v508 = vunpack.c.l.b16 %v473
    %v509 = vunpack.c.h.b16 %v473
    %v510 = vunpack.c.l.b16 %v474
    %v511 = vunpack.c.h.b16 %v474
    %v512 = vunpack.c.l.b16 %v475
    %v513 = vunpack.c.h.b16 %v475
    %v514 = vunpack.c.l.b16 %v476
    %v515 = vunpack.c.h.b16 %v476
    %v516 = vunpack.c.l.b16 %v477
    %v517 = vunpack.c.h.b16 %v477
    %v518 = vunpack.c.l.b16 %v478
    %v519 = vunpack.c.h.b16 %v478
    %v520 = vunpack.c.l.b16 %v479
    %v521 = vunpack.c.h.b16 %v479
    %v522 = vunpack.c.l.b16 %v480
    %v523 = vunpack.c.h.b16 %v480
    %v524 = vunpack.c.l.b16 %v481
    %v525 = vunpack.c.h.b16 %v481
    %v526 = vunpack.c.l.b16 %v482
    %v527 = vunpack.c.h.b16 %v482
    %v528 = vunpack.c.l.b16 %v483
    %v529 = vunpack.c.h.b16 %v483
    %v530 = vunpack.c.l.b16 %v484
    %v531 = vunpack.c.h.b16 %v484
    %v532 = vunpack.c.l.b16 %v485
    %v533 = vunpack.c.h.b16 %v485
    %v534 = vpack.c.b16 %v504, %v502
    %v535 = vpack.c.b16 %v505, %v503
    %v536 = vpack.c.b16 %v508, %v506
    %v537 = vpack.c.b16 %v509, %v507
    %v538 = vpack.c.b16 %v512, %v510
    %v539 = vpack.c.b16 %v513, %v511
    %v540 = vpack.c.b16 %v516, %v514
    %v541 = vpack.c.b16 %v517, %v515
    %v542 = vpack.c.b16 %v520, %v518
    %v543 = vpack.c.b16 %v521, %v519
    %v544 = vpack.c.b16 %v524, %v522
    %v545 = vpack.c.b16 %v525, %v523
    %v546 = vpack.c.b16 %v528, %v526
    %v547 = vpack.c.b16 %v529, %v527
    %v548 = vpack.c.b16 %v532, %v530
    %v549 = vpack.c.b16 %v533, %v531
    %566 = vmatprep.subr.bf16.mxu0 %v535
    %567 = vmatpush1.bf16.msra.mxu0 %v534
    %568 = vmatprep.subr.bf16.mxu0 %v537
    %569 = vmatpush1.bf16.msra.mxu0 %v536
    %570 = vmatprep.subr.bf16.mxu0 %v539
    %571 = vmatpush1.bf16.msra.mxu0 %v538
    %572 = vmatprep.subr.bf16.mxu0 %v541
    %573 = vmatpush1.bf16.msra.mxu0 %v540
    %574 = vmatprep.subr.bf16.mxu0 %v543
    %575 = vmatpush1.bf16.msra.mxu0 %v542
    %576 = vmatprep.subr.bf16.mxu0 %v545
    %577 = vmatpush1.bf16.msra.mxu0 %v544
    %578 = vmatprep.subr.bf16.mxu0 %v547
    %579 = vmatpush1.bf16.msra.mxu0 %v546
    %580 = vmatprep.subr.bf16.mxu0 %v549
    %581 = vmatpush1.bf16.msra.mxu0 %v548
    %582 = vmatprep.subr.bf16.mxu0 0
    %583 = vmatpush1.bf16.msra.mxu0 0
    %584 = vmatprep.subr.bf16.mxu0 0
    %585 = vmatpush1.bf16.msra.mxu0 0
    %586 = vmatprep.subr.bf16.mxu0 0
    %587 = vmatpush1.bf16.msra.mxu0 0
    %588 = vmatprep.subr.bf16.mxu0 0
    %589 = vmatpush1.bf16.msra.mxu0 0
    %590 = vmatprep.subr.bf16.mxu0 0
    %591 = vmatpush1.bf16.msra.mxu0 0
    %592 = vmatprep.subr.bf16.mxu0 0
    %593 = vmatpush1.bf16.msra.mxu0 0
    %594 = vmatprep.subr.bf16.mxu0 0
    %595 = vmatpush1.bf16.msra.mxu0 0
    %596 = vmatprep.subr.bf16.mxu0 0
    %597 = vmatpush1.bf16.msra.mxu0 0
    %598 = vmatprep.mubr.bf16.mxu0 0
    %599 = vmatmul.mubr.bf16.gmra.mrb[0].mxu0 %v189
    %v600 = vpop.f32.mrb[0].mxu0
    %v601 = vadd.f32 0.0, %v600
    %v602 = vpop.f32.mrb[0].mxu0
    %v603 = vadd.f32 0.0, %v602
    %v604 = vpop.f32.mrb[0].mxu0
    %v605 = vadd.f32 0.0, %v604
    %v606 = vpop.f32.mrb[0].mxu0
    %v607 = vadd.f32 0.0, %v606
    %608 = vdwg.mxu0
    %v609 = vadd.f32 %v461, %v601
    %v610 = vadd.f32 %v463, %v603
    %v611 = vadd.f32 %v465, %v605
    %v612 = vadd.f32 %v467, %v607
    %s613 = scalar_lea.vmem [#allocation8], 2
    %v614 = vld [vmem:[%s613] ss:$8 sm:$0x3]
    %v616 = vlaneseq
    %v617 = vshrl.u32 %v616, 7
    %v618 = vsub.s32 0, %v617
    %v619 = vrot.slane %v614, %v618
    %v620 = vlaneseq
    %v621 = vshrl.u32 %v620, 7
    %v622 = vsub.s32 1, %v621
    %v623 = vrot.slane %v614, %v622
    %v626 = vmul.f32 %v609, %v619
    %v627 = vmul.f32 %v610, %v623
    %v628 = vmul.f32 %v611, %v619
    %v629 = vmul.f32 %v612, %v623
    %s630 = scalar_lea.vmem [#allocation8], 3
    %v631 = vld [vmem:[%s630] ss:$8 sm:$0x3]
    %v633 = vlaneseq
    %v634 = vshrl.u32 %v633, 7
    %v635 = vsub.s32 0, %v634
    %v636 = vrot.slane %v631, %v635
    %v637 = vlaneseq
    %v638 = vshrl.u32 %v637, 7
    %v639 = vsub.s32 1, %v638
    %v640 = vrot.slane %v631, %v639
    %v643 = vadd.f32 %v626, %v636
    %v644 = vadd.f32 %v627, %v640
    %v645 = vadd.f32 %v628, %v636
    %v646 = vadd.f32 %v629, %v640
    %vm647 = vcmp.ge.f32.partialorder %v643, 0.0
    %vm648 = vcmp.ge.f32.partialorder %v644, 0.0
    %vm649 = vcmp.ge.f32.partialorder %v645, 0.0
    %vm650 = vcmp.ge.f32.partialorder %v646, 0.0
    %s651 = scalar_lea.vmem [#allocation8], 4
    %v652 = vld [vmem:[%s651] ss:$8 sm:$0x3]
    %v654 = vlaneseq
    %v655 = vshrl.u32 %v654, 7
    %v656 = vsub.s32 0, %v655
    %v657 = vrot.slane %v652, %v656
    %v658 = vlaneseq
    %v659 = vshrl.u32 %v658, 7
    %v660 = vsub.s32 1, %v659
    %v661 = vrot.slane %v652, %v660
    %v664 = vmul.f32 %v657, %v643
    %v665 = vmul.f32 %v661, %v644
    %v666 = vmul.f32 %v657, %v645
    %v667 = vmul.f32 %v661, %v646
    %v668 = vsel %vm647, %v643, %v664
    %v669 = vsel %vm648, %v644, %v665
    %v670 = vsel %vm649, %v645, %v666
    %v671 = vsel %vm650, %v646, %v667
    %v672 = vpack.c.bf16 %v670, %v668
    %v673 = vpack.c.bf16 %v671, %v669
    %674 = vmatprep.subr.bf16.mxu0 %v673
    %675 = vmatpush1.bf16.msra.mxu0 %v672
    %676 = vmatprep.subr.bf16.mxu0 0
    %677 = vmatpush1.bf16.msra.mxu0 0
    %678 = vmatprep.subr.bf16.mxu0 0
    %679 = vmatpush1.bf16.msra.mxu0 0
    %680 = vmatprep.subr.bf16.mxu0 0
    %681 = vmatpush1.bf16.msra.mxu0 0
    %682 = vmatprep.subr.bf16.mxu0 0
    %683 = vmatpush1.bf16.msra.mxu0 0
    %684 = vmatprep.subr.bf16.mxu0 0
    %685 = vmatpush1.bf16.msra.mxu0 0
    %686 = vmatprep.subr.bf16.mxu0 0
    %687 = vmatpush1.bf16.msra.mxu0 0
    %688 = vmatprep.subr.bf16.mxu0 0
    %689 = vmatpush1.bf16.msra.mxu0 0
    %690 = vmatprep.subr.bf16.mxu0 0
    %691 = vmatpush1.bf16.msra.mxu0 0
    %692 = vmatprep.subr.bf16.mxu0 0
    %693 = vmatpush1.bf16.msra.mxu0 0
    %694 = vmatprep.subr.bf16.mxu0 0
    %695 = vmatpush1.bf16.msra.mxu0 0
    %696 = vmatprep.subr.bf16.mxu0 0
    %697 = vmatpush1.bf16.msra.mxu0 0
    %698 = vmatprep.subr.bf16.mxu0 0
    %699 = vmatpush1.bf16.msra.mxu0 0
    %700 = vmatprep.subr.bf16.mxu0 0
    %701 = vmatpush1.bf16.msra.mxu0 0
    %702 = vmatprep.subr.bf16.mxu0 0
    %703 = vmatpush1.bf16.msra.mxu0 0
    %704 = vmatprep.subr.bf16.mxu0 0
    %705 = vmatpush1.bf16.msra.mxu0 0
    %706 = vmatprep.mubr.bf16.mxu0 0
    %707 = vmatmul.mubr.bf16.gmra.mrb[0].mxu0 %v101
    %v708 = vpop.f32.mrb[0].mxu0
    %v709 = vadd.f32 0.0, %v708
    %v710 = vpop.f32.mrb[0].mxu0
    %v711 = vadd.f32 0.0, %v710
    %v712 = vpop.f32.mrb[0].mxu0
    %v713 = vadd.f32 0.0, %v712
    %v714 = vpop.f32.mrb[0].mxu0
    %v715 = vadd.f32 0.0, %v714
    %716 = vdwg.mxu0
    %v717 = vpack.c.bf16 %v713, %v709
    %v718 = vpack.c.bf16 %v715, %v711
    %719 = vmatprep.subr.bf16.mxu0 %v673
    %720 = vmatpush1.bf16.msra.mxu0 %v672
    %721 = vmatprep.subr.bf16.mxu0 0
    %722 = vmatpush1.bf16.msra.mxu0 0
    %723 = vmatprep.subr.bf16.mxu0 0
    %724 = vmatpush1.bf16.msra.mxu0 0
    %725 = vmatprep.subr.bf16.mxu0 0
    %726 = vmatpush1.bf16.msra.mxu0 0
    %727 = vmatprep.subr.bf16.mxu0 0
    %728 = vmatpush1.bf16.msra.mxu0 0
    %729 = vmatprep.subr.bf16.mxu0 0
    %730 = vmatpush1.bf16.msra.mxu0 0
    %731 = vmatprep.subr.bf16.mxu0 0
    %732 = vmatpush1.bf16.msra.mxu0 0
    %733 = vmatprep.subr.bf16.mxu0 0
    %734 = vmatpush1.bf16.msra.mxu0 0
    %735 = vmatprep.subr.bf16.mxu0 0
    %736 = vmatpush1.bf16.msra.mxu0 0
    %737 = vmatprep.subr.bf16.mxu0 0
    %738 = vmatpush1.bf16.msra.mxu0 0
    %739 = vmatprep.subr.bf16.mxu0 0
    %740 = vmatpush1.bf16.msra.mxu0 0
    %741 = vmatprep.subr.bf16.mxu0 0
    %742 = vmatpush1.bf16.msra.mxu0 0
    %743 = vmatprep.subr.bf16.mxu0 0
    %744 = vmatpush1.bf16.msra.mxu0 0
    %745 = vmatprep.subr.bf16.mxu0 0
    %746 = vmatpush1.bf16.msra.mxu0 0
    %747 = vmatprep.subr.bf16.mxu0 0
    %748 = vmatpush1.bf16.msra.mxu0 0
    %749 = vmatprep.subr.bf16.mxu0 0
    %750 = vmatpush1.bf16.msra.mxu0 0
    %751 = vmatprep.mubr.bf16.mxu0 0
    %752 = vmatmul.mubr.bf16.gmra.mrb[0].mxu0 %v146
    %v753 = vpop.f32.mrb[0].mxu0
    %v754 = vadd.f32 0.0, %v753
    %v755 = vpop.f32.mrb[0].mxu0
    %v756 = vadd.f32 0.0, %v755
    %v757 = vpop.f32.mrb[0].mxu0
    %v758 = vadd.f32 0.0, %v757
    %v759 = vpop.f32.mrb[0].mxu0
    %v760 = vadd.f32 0.0, %v759
    %761 = vdwg.mxu0
    %v762 = vpack.c.bf16 %v758, %v754
    %v763 = vpack.c.bf16 %v760, %v756
    %v764 = vld [vmem:[#allocation7] sm:$0xf]
    %v765 = vld [vmem:[#allocation7 + $0x4] sm:$0xf]
    %v766 = vld [vmem:[#allocation7 + $0x8] sm:$0xf]
    %v767 = vld [vmem:[#allocation7 + $0xc] sm:$0xf]
    %v768 = vld [vmem:[#allocation7 + $0x10] sm:$0xf]
    %v769 = vld [vmem:[#allocation7 + $0x14] sm:$0xf]
    %v770 = vld [vmem:[#allocation7 + $0x18] sm:$0xf]
    %v771 = vld [vmem:[#allocation7 + $0x1c] sm:$0xf]
    %v772 = vld [vmem:[#allocation7 + $0x20] sm:$0xf]
    %v773 = vld [vmem:[#allocation7 + $0x24] sm:$0xf]
    %v774 = vld [vmem:[#allocation7 + $0x28] sm:$0xf]
    %v775 = vld [vmem:[#allocation7 + $0x2c] sm:$0xf]
    %v776 = vld [vmem:[#allocation7 + $0x30] sm:$0xf]
    %v777 = vld [vmem:[#allocation7 + $0x34] sm:$0xf]
    %v778 = vld [vmem:[#allocation7 + $0x38] sm:$0xf]
    %v779 = vld [vmem:[#allocation7 + $0x3c] sm:$0xf]
    %v780 = vld [vmem:[#allocation7 + $0x40] sm:$0xf]
    %v781 = vld [vmem:[#allocation7 + $0x44] sm:$0xf]
    %v782 = vld [vmem:[#allocation7 + $0x48] sm:$0xf]
    %v783 = vld [vmem:[#allocation7 + $0x4c] sm:$0xf]
    %v784 = vld [vmem:[#allocation7 + $0x50] sm:$0xf]
    %v785 = vld [vmem:[#allocation7 + $0x54] sm:$0xf]
    %v786 = vld [vmem:[#allocation7 + $0x58] sm:$0xf]
    %v787 = vld [vmem:[#allocation7 + $0x5c] sm:$0xf]
    %v788 = vld [vmem:[#allocation7 + $0x60] sm:$0xf]
    %v789 = vld [vmem:[#allocation7 + $0x64] sm:$0xf]
    %v790 = vld [vmem:[#allocation7 + $0x68] sm:$0xf]
    %v791 = vld [vmem:[#allocation7 + $0x6c] sm:$0xf]
    %v792 = vld [vmem:[#allocation7 + $0x70] sm:$0xf]
    %v793 = vld [vmem:[#allocation7 + $0x74] sm:$0xf]
    %v794 = vld [vmem:[#allocation7 + $0x78] sm:$0xf]
    %v795 = vld [vmem:[#allocation7 + $0x7c] sm:$0xf]
    %s796 = scalar_lea.vmem [#allocation7], 128
    %v797 = vld [vmem:[%s796] sm:$0xf]
    %v798 = vld [vmem:[%s796 + $0x4] sm:$0xf]
    %v799 = vld [vmem:[%s796 + $0x8] sm:$0xf]
    %v800 = vld [vmem:[%s796 + $0xc] sm:$0xf]
    %v801 = vld [vmem:[%s796 + $0x10] sm:$0xf]
    %v802 = vld [vmem:[%s796 + $0x14] sm:$0xf]
    %v803 = vld [vmem:[%s796 + $0x18] sm:$0xf]
    %v804 = vld [vmem:[%s796 + $0x1c] sm:$0xf]
    %v805 = vld [vmem:[%s796 + $0x20] sm:$0xf]
    %v806 = vld [vmem:[%s796 + $0x24] sm:$0xf]
    %v807 = vld [vmem:[%s796 + $0x28] sm:$0xf]
    %v808 = vld [vmem:[%s796 + $0x2c] sm:$0xf]
    %v809 = vld [vmem:[%s796 + $0x30] sm:$0xf]
    %v810 = vld [vmem:[%s796 + $0x34] sm:$0xf]
    %v811 = vld [vmem:[%s796 + $0x38] sm:$0xf]
    %v812 = vld [vmem:[%s796 + $0x3c] sm:$0xf]
    %v813 = vld [vmem:[%s796 + $0x40] sm:$0xf]
    %v814 = vld [vmem:[%s796 + $0x44] sm:$0xf]
    %v815 = vld [vmem:[%s796 + $0x48] sm:$0xf]
    %v816 = vld [vmem:[%s796 + $0x4c] sm:$0xf]
    %v817 = vld [vmem:[%s796 + $0x50] sm:$0xf]
    %v818 = vld [vmem:[%s796 + $0x54] sm:$0xf]
    %v819 = vld [vmem:[%s796 + $0x58] sm:$0xf]
    %v820 = vld [vmem:[%s796 + $0x5c] sm:$0xf]
    %v821 = vld [vmem:[%s796 + $0x60] sm:$0xf]
    %v822 = vld [vmem:[%s796 + $0x64] sm:$0xf]
    %v823 = vld [vmem:[%s796 + $0x68] sm:$0xf]
    %v824 = vld [vmem:[%s796 + $0x6c] sm:$0xf]
    %v825 = vld [vmem:[%s796 + $0x70] sm:$0xf]
    %v826 = vld [vmem:[%s796 + $0x74] sm:$0xf]
    %v827 = vld [vmem:[%s796 + $0x78] sm:$0xf]
    %v828 = vld [vmem:[%s796 + $0x7c] sm:$0xf]
    %v861 = vunpack.c.l.b16 %v797
    %v862 = vunpack.c.l.b16 %v798
    %v863 = vunpack.c.l.b16 %v799
    %v864 = vunpack.c.l.b16 %v800
    %v865 = vunpack.c.l.b16 %v801
    %v866 = vunpack.c.l.b16 %v802
    %v867 = vunpack.c.l.b16 %v803
    %v868 = vunpack.c.l.b16 %v804
    %v869 = vunpack.c.l.b16 %v805
    %v870 = vunpack.c.l.b16 %v806
    %v871 = vunpack.c.l.b16 %v807
    %v872 = vunpack.c.l.b16 %v808
    %v873 = vunpack.c.l.b16 %v809
    %v874 = vunpack.c.l.b16 %v810
    %v875 = vunpack.c.l.b16 %v811
    %v876 = vunpack.c.l.b16 %v812
    %v877 = vunpack.c.l.b16 %v813
    %v878 = vunpack.c.l.b16 %v814
    %v879 = vunpack.c.l.b16 %v815
    %v880 = vunpack.c.l.b16 %v816
    %v881 = vunpack.c.l.b16 %v817
    %v882 = vunpack.c.l.b16 %v818
    %v883 = vunpack.c.l.b16 %v819
    %v884 = vunpack.c.l.b16 %v820
    %v885 = vunpack.c.l.b16 %v821
    %v886 = vunpack.c.l.b16 %v822
    %v887 = vunpack.c.l.b16 %v823
    %v888 = vunpack.c.l.b16 %v824
    %v889 = vunpack.c.l.b16 %v825
    %v890 = vunpack.c.l.b16 %v826
    %v891 = vunpack.c.l.b16 %v827
    %v892 = vunpack.c.l.b16 %v828
    %v893 = vpack.c.b16 %v862, %v861
    %v894 = vpack.c.b16 %v864, %v863
    %v895 = vpack.c.b16 %v866, %v865
    %v896 = vpack.c.b16 %v868, %v867
    %v897 = vpack.c.b16 %v870, %v869
    %v898 = vpack.c.b16 %v872, %v871
    %v899 = vpack.c.b16 %v874, %v873
    %v900 = vpack.c.b16 %v876, %v875
    %v901 = vpack.c.b16 %v878, %v877
    %v902 = vpack.c.b16 %v880, %v879
    %v903 = vpack.c.b16 %v882, %v881
    %v904 = vpack.c.b16 %v884, %v883
    %v905 = vpack.c.b16 %v886, %v885
    %v906 = vpack.c.b16 %v888, %v887
    %v907 = vpack.c.b16 %v890, %v889
    %v908 = vpack.c.b16 %v892, %v891
    %925 = vmatprep.subr.bf16.mxu0 0
    %926 = vmatpush1.bf16.msra.mxu0 %v893
    %927 = vmatprep.subr.bf16.mxu0 0
    %928 = vmatpush1.bf16.msra.mxu0 %v894
    %929 = vmatprep.subr.bf16.mxu0 0
    %930 = vmatpush1.bf16.msra.mxu0 %v895
    %931 = vmatprep.subr.bf16.mxu0 0
    %932 = vmatpush1.bf16.msra.mxu0 %v896
    %933 = vmatprep.subr.bf16.mxu0 0
    %934 = vmatpush1.bf16.msra.mxu0 %v897
    %935 = vmatprep.subr.bf16.mxu0 0
    %936 = vmatpush1.bf16.msra.mxu0 %v898
    %937 = vmatprep.subr.bf16.mxu0 0
    %938 = vmatpush1.bf16.msra.mxu0 %v899
    %939 = vmatprep.subr.bf16.mxu0 0
    %940 = vmatpush1.bf16.msra.mxu0 %v900
    %941 = vmatprep.subr.bf16.mxu0 0
    %942 = vmatpush1.bf16.msra.mxu0 %v901
    %943 = vmatprep.subr.bf16.mxu0 0
    %944 = vmatpush1.bf16.msra.mxu0 %v902
    %945 = vmatprep.subr.bf16.mxu0 0
    %946 = vmatpush1.bf16.msra.mxu0 %v903
    %947 = vmatprep.subr.bf16.mxu0 0
    %948 = vmatpush1.bf16.msra.mxu0 %v904
    %949 = vmatprep.subr.bf16.mxu0 0
    %950 = vmatpush1.bf16.msra.mxu0 %v905
    %951 = vmatprep.subr.bf16.mxu0 0
    %952 = vmatpush1.bf16.msra.mxu0 %v906
    %953 = vmatprep.subr.bf16.mxu0 0
    %954 = vmatpush1.bf16.msra.mxu0 %v907
    %955 = vmatprep.subr.bf16.mxu0 0
    %956 = vmatpush1.bf16.msra.mxu0 %v908
    %957 = vmatprep.mubr.bf16.mxu0 %v673
    %958 = vmatmul.mubr.bf16.gmra.mrb[0].mxu0 %v672
    %v959 = vpop.f32.mrb[0].mxu0
    %v960 = vadd.f32 0.0, %v959
    %v961 = vpop.f32.mrb[0].mxu0
    %v962 = vpop.f32.mrb[0].mxu0
    %v963 = vadd.f32 0.0, %v962
    %v964 = vpop.f32.mrb[0].mxu0
    %965 = vdwg.mxu0
    %v998 = vunpack.c.l.b16 %v764
    %v999 = vunpack.c.l.b16 %v765
    %v1000 = vunpack.c.l.b16 %v766
    %v1001 = vunpack.c.l.b16 %v767
    %v1002 = vunpack.c.l.b16 %v768
    %v1003 = vunpack.c.l.b16 %v769
    %v1004 = vunpack.c.l.b16 %v770
    %v1005 = vunpack.c.l.b16 %v771
    %v1006 = vunpack.c.l.b16 %v772
    %v1007 = vunpack.c.l.b16 %v773
    %v1008 = vunpack.c.l.b16 %v774
    %v1009 = vunpack.c.l.b16 %v775
    %v1010 = vunpack.c.l.b16 %v776
    %v1011 = vunpack.c.l.b16 %v777
    %v1012 = vunpack.c.l.b16 %v778
    %v1013 = vunpack.c.l.b16 %v779
    %v1014 = vunpack.c.l.b16 %v780
    %v1015 = vunpack.c.l.b16 %v781
    %v1016 = vunpack.c.l.b16 %v782
    %v1017 = vunpack.c.l.b16 %v783
    %v1018 = vunpack.c.l.b16 %v784
    %v1019 = vunpack.c.l.b16 %v785
    %v1020 = vunpack.c.l.b16 %v786
    %v1021 = vunpack.c.l.b16 %v787
    %v1022 = vunpack.c.l.b16 %v788
    %v1023 = vunpack.c.l.b16 %v789
    %v1024 = vunpack.c.l.b16 %v790
    %v1025 = vunpack.c.l.b16 %v791
    %v1026 = vunpack.c.l.b16 %v792
    %v1027 = vunpack.c.l.b16 %v793
    %v1028 = vunpack.c.l.b16 %v794
    %v1029 = vunpack.c.l.b16 %v795
    %v1030 = vpack.c.b16 %v999, %v998
    %v1031 = vpack.c.b16 %v1001, %v1000
    %v1032 = vpack.c.b16 %v1003, %v1002
    %v1033 = vpack.c.b16 %v1005, %v1004
    %v1034 = vpack.c.b16 %v1007, %v1006
    %v1035 = vpack.c.b16 %v1009, %v1008
    %v1036 = vpack.c.b16 %v1011, %v1010
    %v1037 = vpack.c.b16 %v1013, %v1012
    %v1038 = vpack.c.b16 %v1015, %v1014
    %v1039 = vpack.c.b16 %v1017, %v1016
    %v1040 = vpack.c.b16 %v1019, %v1018
    %v1041 = vpack.c.b16 %v1021, %v1020
    %v1042 = vpack.c.b16 %v1023, %v1022
    %v1043 = vpack.c.b16 %v1025, %v1024
    %v1044 = vpack.c.b16 %v1027, %v1026
    %v1045 = vpack.c.b16 %v1029, %v1028
    %1062 = vmatprep.subr.bf16.mxu0 0
    %1063 = vmatpush1.bf16.msra.mxu0 %v1030
    %1064 = vmatprep.subr.bf16.mxu0 0
    %1065 = vmatpush1.bf16.msra.mxu0 %v1031
    %1066 = vmatprep.subr.bf16.mxu0 0
    %1067 = vmatpush1.bf16.msra.mxu0 %v1032
    %1068 = vmatprep.subr.bf16.mxu0 0
    %1069 = vmatpush1.bf16.msra.mxu0 %v1033
    %1070 = vmatprep.subr.bf16.mxu0 0
    %1071 = vmatpush1.bf16.msra.mxu0 %v1034
    %1072 = vmatprep.subr.bf16.mxu0 0
    %1073 = vmatpush1.bf16.msra.mxu0 %v1035
    %1074 = vmatprep.subr.bf16.mxu0 0
    %1075 = vmatpush1.bf16.msra.mxu0 %v1036
    %1076 = vmatprep.subr.bf16.mxu0 0
    %1077 = vmatpush1.bf16.msra.mxu0 %v1037
    %1078 = vmatprep.subr.bf16.mxu0 0
    %1079 = vmatpush1.bf16.msra.mxu0 %v1038
    %1080 = vmatprep.subr.bf16.mxu0 0
    %1081 = vmatpush1.bf16.msra.mxu0 %v1039
    %1082 = vmatprep.subr.bf16.mxu0 0
    %1083 = vmatpush1.bf16.msra.mxu0 %v1040
    %1084 = vmatprep.subr.bf16.mxu0 0
    %1085 = vmatpush1.bf16.msra.mxu0 %v1041
    %1086 = vmatprep.subr.bf16.mxu0 0
    %1087 = vmatpush1.bf16.msra.mxu0 %v1042
    %1088 = vmatprep.subr.bf16.mxu0 0
    %1089 = vmatpush1.bf16.msra.mxu0 %v1043
    %1090 = vmatprep.subr.bf16.mxu0 0
    %1091 = vmatpush1.bf16.msra.mxu0 %v1044
    %1092 = vmatprep.subr.bf16.mxu0 0
    %1093 = vmatpush1.bf16.msra.mxu0 %v1045
    %1094 = vmatprep.mubr.bf16.mxu0 %v718
    %1095 = vmatmul.mubr.bf16.gmra.mrb[0].mxu0 %v717
    %v1096 = vpop.f32.mrb[0].mxu0
    %v1097 = vadd.f32 %v960, %v1096
    %v1098 = vpop.f32.mrb[0].mxu0
    %v1099 = vpop.f32.mrb[0].mxu0
    %v1100 = vadd.f32 %v963, %v1099
    %v1101 = vpop.f32.mrb[0].mxu0
    %1102 = vdwg.mxu0
    %s1103 = scalar_lea.vmem [#allocation7], 256
    %v1104 = vld [vmem:[%s1103] sm:$0xf]
    %v1105 = vld [vmem:[%s1103 + $0x4] sm:$0xf]
    %v1106 = vld [vmem:[%s1103 + $0x8] sm:$0xf]
    %v1107 = vld [vmem:[%s1103 + $0xc] sm:$0xf]
    %v1108 = vld [vmem:[%s1103 + $0x10] sm:$0xf]
    %v1109 = vld [vmem:[%s1103 + $0x14] sm:$0xf]
    %v1110 = vld [vmem:[%s1103 + $0x18] sm:$0xf]
    %v1111 = vld [vmem:[%s1103 + $0x1c] sm:$0xf]
    %v1112 = vld [vmem:[%s1103 + $0x20] sm:$0xf]
    %v1113 = vld [vmem:[%s1103 + $0x24] sm:$0xf]
    %v1114 = vld [vmem:[%s1103 + $0x28] sm:$0xf]
    %v1115 = vld [vmem:[%s1103 + $0x2c] sm:$0xf]
    %v1116 = vld [vmem:[%s1103 + $0x30] sm:$0xf]
    %v1117 = vld [vmem:[%s1103 + $0x34] sm:$0xf]
    %v1118 = vld [vmem:[%s1103 + $0x38] sm:$0xf]
    %v1119 = vld [vmem:[%s1103 + $0x3c] sm:$0xf]
    %v1120 = vld [vmem:[%s1103 + $0x40] sm:$0xf]
    %v1121 = vld [vmem:[%s1103 + $0x44] sm:$0xf]
    %v1122 = vld [vmem:[%s1103 + $0x48] sm:$0xf]
    %v1123 = vld [vmem:[%s1103 + $0x4c] sm:$0xf]
    %v1124 = vld [vmem:[%s1103 + $0x50] sm:$0xf]
    %v1125 = vld [vmem:[%s1103 + $0x54] sm:$0xf]
    %v1126 = vld [vmem:[%s1103 + $0x58] sm:$0xf]
    %v1127 = vld [vmem:[%s1103 + $0x5c] sm:$0xf]
    %v1128 = vld [vmem:[%s1103 + $0x60] sm:$0xf]
    %v1129 = vld [vmem:[%s1103 + $0x64] sm:$0xf]
    %v1130 = vld [vmem:[%s1103 + $0x68] sm:$0xf]
    %v1131 = vld [vmem:[%s1103 + $0x6c] sm:$0xf]
    %v1132 = vld [vmem:[%s1103 + $0x70] sm:$0xf]
    %v1133 = vld [vmem:[%s1103 + $0x74] sm:$0xf]
    %v1134 = vld [vmem:[%s1103 + $0x78] sm:$0xf]
    %v1135 = vld [vmem:[%s1103 + $0x7c] sm:$0xf]
    %v1168 = vunpack.c.l.b16 %v1104
    %v1169 = vunpack.c.l.b16 %v1105
    %v1170 = vunpack.c.l.b16 %v1106
    %v1171 = vunpack.c.l.b16 %v1107
    %v1172 = vunpack.c.l.b16 %v1108
    %v1173 = vunpack.c.l.b16 %v1109
    %v1174 = vunpack.c.l.b16 %v1110
    %v1175 = vunpack.c.l.b16 %v1111
    %v1176 = vunpack.c.l.b16 %v1112
    %v1177 = vunpack.c.l.b16 %v1113
    %v1178 = vunpack.c.l.b16 %v1114
    %v1179 = vunpack.c.l.b16 %v1115
    %v1180 = vunpack.c.l.b16 %v1116
    %v1181 = vunpack.c.l.b16 %v1117
    %v1182 = vunpack.c.l.b16 %v1118
    %v1183 = vunpack.c.l.b16 %v1119
    %v1184 = vunpack.c.l.b16 %v1120
    %v1185 = vunpack.c.l.b16 %v1121
    %v1186 = vunpack.c.l.b16 %v1122
    %v1187 = vunpack.c.l.b16 %v1123
    %v1188 = vunpack.c.l.b16 %v1124
    %v1189 = vunpack.c.l.b16 %v1125
    %v1190 = vunpack.c.l.b16 %v1126
    %v1191 = vunpack.c.l.b16 %v1127
    %v1192 = vunpack.c.l.b16 %v1128
    %v1193 = vunpack.c.l.b16 %v1129
    %v1194 = vunpack.c.l.b16 %v1130
    %v1195 = vunpack.c.l.b16 %v1131
    %v1196 = vunpack.c.l.b16 %v1132
    %v1197 = vunpack.c.l.b16 %v1133
    %v1198 = vunpack.c.l.b16 %v1134
    %v1199 = vunpack.c.l.b16 %v1135
    %v1200 = vpack.c.b16 %v1169, %v1168
    %v1201 = vpack.c.b16 %v1171, %v1170
    %v1202 = vpack.c.b16 %v1173, %v1172
    %v1203 = vpack.c.b16 %v1175, %v1174
    %v1204 = vpack.c.b16 %v1177, %v1176
    %v1205 = vpack.c.b16 %v1179, %v1178
    %v1206 = vpack.c.b16 %v1181, %v1180
    %v1207 = vpack.c.b16 %v1183, %v1182
    %v1208 = vpack.c.b16 %v1185, %v1184
    %v1209 = vpack.c.b16 %v1187, %v1186
    %v1210 = vpack.c.b16 %v1189, %v1188
    %v1211 = vpack.c.b16 %v1191, %v1190
    %v1212 = vpack.c.b16 %v1193, %v1192
    %v1213 = vpack.c.b16 %v1195, %v1194
    %v1214 = vpack.c.b16 %v1197, %v1196
    %v1215 = vpack.c.b16 %v1199, %v1198
    %1232 = vmatprep.subr.bf16.mxu0 0
    %1233 = vmatpush1.bf16.msra.mxu0 %v1200
    %1234 = vmatprep.subr.bf16.mxu0 0
    %1235 = vmatpush1.bf16.msra.mxu0 %v1201
    %1236 = vmatprep.subr.bf16.mxu0 0
    %1237 = vmatpush1.bf16.msra.mxu0 %v1202
    %1238 = vmatprep.subr.bf16.mxu0 0
    %1239 = vmatpush1.bf16.msra.mxu0 %v1203
    %1240 = vmatprep.subr.bf16.mxu0 0
    %1241 = vmatpush1.bf16.msra.mxu0 %v1204
    %1242 = vmatprep.subr.bf16.mxu0 0
    %1243 = vmatpush1.bf16.msra.mxu0 %v1205
    %1244 = vmatprep.subr.bf16.mxu0 0
    %1245 = vmatpush1.bf16.msra.mxu0 %v1206
    %1246 = vmatprep.subr.bf16.mxu0 0
    %1247 = vmatpush1.bf16.msra.mxu0 %v1207
    %1248 = vmatprep.subr.bf16.mxu0 0
    %1249 = vmatpush1.bf16.msra.mxu0 %v1208
    %1250 = vmatprep.subr.bf16.mxu0 0
    %1251 = vmatpush1.bf16.msra.mxu0 %v1209
    %1252 = vmatprep.subr.bf16.mxu0 0
    %1253 = vmatpush1.bf16.msra.mxu0 %v1210
    %1254 = vmatprep.subr.bf16.mxu0 0
    %1255 = vmatpush1.bf16.msra.mxu0 %v1211
    %1256 = vmatprep.subr.bf16.mxu0 0
    %1257 = vmatpush1.bf16.msra.mxu0 %v1212
    %1258 = vmatprep.subr.bf16.mxu0 0
    %1259 = vmatpush1.bf16.msra.mxu0 %v1213
    %1260 = vmatprep.subr.bf16.mxu0 0
    %1261 = vmatpush1.bf16.msra.mxu0 %v1214
    %1262 = vmatprep.subr.bf16.mxu0 0
    %1263 = vmatpush1.bf16.msra.mxu0 %v1215
    %1264 = vmatprep.mubr.bf16.mxu0 %v763
    %1265 = vmatmul.mubr.bf16.gmra.mrb[0].mxu0 %v762
    %v1266 = vpop.f32.mrb[0].mxu0
    %v1267 = vadd.f32 0.0, %v1266
    %v1268 = vpop.f32.mrb[0].mxu0
    %v1269 = vpop.f32.mrb[0].mxu0
    %v1270 = vadd.f32 0.0, %v1269
    %v1271 = vpop.f32.mrb[0].mxu0
    %1272 = vdwg.mxu0
    %v1273 = vadd.f32 %v1097, %v1267
    %v1274 = vadd.f32 %v1100, %v1270
    %v1275 = vld [vmem:[#allocation8 + $0x5] ss:$0 sm:$0xff]
    %v1276 = vmul.f32 %v1273, %v1275
    %v1277 = vmul.f32 %v1274, %v1275
    %v1278 = vld [vmem:[#allocation8 + $0x6] ss:$0 sm:$0xff]
    %v1279 = vadd.f32 %v1276, %v1278
    %v1280 = vadd.f32 %v1277, %v1278
    %v1281 = vadd.f32 %v1279, %v90
    %v1282 = vadd.f32 %v1280, %v91
    %1283 = vst [vmem:[#allocation10] sm:$0xff] %v1281
    %1284 = vst [vmem:[#allocation10 + $0x8] sm:$0xff] %v1282
    // Predicated region
    $region34: #{tpu_custom_call.1} parent=1 // pred_check
      _
    $region35: #{tpu_custom_call.1} parent=1 // pred_check_branch
      %1286 = sbr.rel (0) target = $region37
    $region36: #{tpu_custom_call.1} parent=1 // pred_region
      %s1288 = ssub.s32 256, 256
      %1289 = vsyncadd [#allocation4], %s1288
      %s1290 = sshll.u32 [#allocation10], 4
      %s1291 = int_to_ptr.vmem [resolvable:$true] %s1290
      %1296 = dma.vmem_to_hbm [thread:$0]  %s1291, 256, %s4, [#allocation4], 128, 128, 8
    $region37: #{tpu_custom_call.1} parent=1 // pred_fallthru
      _
    // Predicated region
    $region38: #{tpu_custom_call.1} parent=1 // pred_check
      _
    $region39: #{tpu_custom_call.1} parent=1 // pred_check_branch
      %1298 = sbr.rel (0) target = $region41
    $region40: #{tpu_custom_call.1} parent=1 // pred_region
      %1299 = dma.done [#allocation4], 256
    $region41: #{tpu_custom_call.1} parent=1 // pred_fallthru
      _
    %1300 = vsyncpa [#allocation3], 1
    %1301 = vsyncpa [#allocation6], 1
    %1302 = vsyncpa [#allocation9], 1
    %1303 = vsyncpa [#allocation4], 1

</llo_original>
